<compile_context>
chip_gen: v7x
topology: tpu7x:2x2x1
jax: 0.10.0
libtpu: 0.0.40
codegen_flags: <defaults>
</compile_context>

<pallas_src>
import functools

import jax
import jax.numpy as jnp
from jax.experimental import pallas as pl
from jax.experimental.pallas import tpu as pltpu

# ------------- small config (PyTorch defaults scaled down for the demo) -------------
NC_X = [8, 16, 32, 64]     # torch default [64, 128, 256, 512]
OUT_NC = 1
NB = 1
N_ITER = 1
HYPA_NC = 256

# MXU operand / activation-storage dtype for the neural-net conv path
# (accumulation + epilogue math stay f32).  FFT / least-squares solver paths
# stay f32 end-to-end (Cholesky stability).
CONV_MXU_DTYPE = jnp.bfloat16
CONV_ACT_DTYPE = jnp.bfloat16


# ==================================== helpers ====================================

def _round_up(x, m):
    return ((x + m - 1) // m) * m


def _pick_tile(dim, unit, cap, min_blocks=1):
    """Return (padded_dim, tile).

    tile = largest multiple of `unit` <= cap keeping the number of blocks
    minimal (>= min_blocks when the dim is big enough to split); the dim is
    padded up to n_blocks * tile.  Never falls back to tiny tiles."""
    p0 = _round_up(dim, unit)
    nb = -(-p0 // cap)
    if min_blocks > nb and p0 >= min_blocks * 2 * unit:
        nb = min_blocks
    tile = _round_up(-(-p0 // nb), unit)
    return nb * tile, tile


def _maybe_cast(x, dtype):
    return x if x.dtype == dtype else x.astype(dtype)


def _maybe_pad2(x, p0, p1):
    if p0 == 0 and p1 == 0:
        return x
    return jnp.pad(x, ((0, p0), (0, p1)))


def _full_spec(shape):
    nd = len(shape)
    return pl.BlockSpec(shape, lambda i, nd=nd: (0,) * nd)


def _vmem_limit(nbytes):
    return int(min(max(2 * nbytes, 32 << 20), 64 << 20))


# ==================================== Pallas kernels ====================================

def _mm_body(a_ref, b_ref, bias_ref, o_ref, acc_ref, act):
    k = pl.program_id(2)

    @pl.when(k == 0)
    def _():
        acc_ref[...] = jnp.zeros_like(acc_ref)

    acc_ref[...] += jnp.dot(a_ref[...], b_ref[...], preferred_element_type=jnp.float32)

    @pl.when(k == pl.num_programs(2) - 1)
    def _():
        acc = acc_ref[...]
        if bias_ref is not None:
            acc = acc + bias_ref[...]          # (tm, 1) broadcast over lanes
        if act == "relu":
            acc = jnp.maximum(acc, 0.0)
        elif act == "sigmoid":
            acc = jax.nn.sigmoid(acc)
        elif act == "softplus":
            acc = jax.nn.softplus(acc)
        o_ref[...] = acc.astype(o_ref.dtype)


def _mm_kernel(a_ref, b_ref, o_ref, acc_ref, *, act):
    _mm_body(a_ref, b_ref, None, o_ref, acc_ref, act)


def _mm_kernel_bias(a_ref, b_ref, bias_ref, o_ref, acc_ref, *, act):
    _mm_body(a_ref, b_ref, bias_ref, o_ref, acc_ref, act)


def pallas_matmul(a, b, bias=None, act="none",
                  mxu_dtype=jnp.float32, out_dtype=jnp.float32):
    """(M,K)@(K,N) (+ per-row bias) with fused activation, tiled + pipelined.

    Callers arrange N to be the large (spatial) axis so output stores are
    lane-dense.  Accumulation and epilogue math are always f32; `mxu_dtype`
    sets the MXU operand precision, `out_dtype` the store precision."""
    M, K = a.shape
    K2, N = b.shape
    assert K2 == K
    m_unit = 16 if jnp.dtype(mxu_dtype).itemsize == 2 else 8   # bf16 sublane packing
    Mp, tm = _pick_tile(M, m_unit, 256)
    # Keep >= 2 lane blocks when N is large so v7x's second TensorCore gets work.
    Np, tn = _pick_tile(N, 128, 1024, min_blocks=2 if N >= 512 else 1)
    Kp, tk = _pick_tile(K, 128, 1024)

    a_p = _maybe_pad2(_maybe_cast(a, mxu_dtype), Mp - M, Kp - K)
    b_p = _maybe_pad2(_maybe_cast(b, mxu_dtype), Kp - K, Np - N)

    in_specs = [pl.BlockSpec((tm, tk), lambda i, j, k: (i, k)),
                pl.BlockSpec((tk, tn), lambda i, j, k: (k, j))]
    args = [a_p, b_p]
    if bias is not None:
        bias_p = jnp.pad(jnp.reshape(bias, (M, 1)).astype(jnp.float32),
                         ((0, Mp - M), (0, 0)))
        in_specs.append(pl.BlockSpec((tm, 1), lambda i, j, k: (i, 0)))
        args.append(bias_p)
        kernel = functools.partial(_mm_kernel_bias, act=act)
    else:
        kernel = functools.partial(_mm_kernel, act=act)

    in_b = jnp.dtype(mxu_dtype).itemsize
    out_b = jnp.dtype(out_dtype).itemsize
    footprint = (2 * (tm * tk + tk * tn) * in_b     # double-buffered operands
                 + 2 * tm * tn * out_b              # double-buffered output
                 + tm * tn * 4 + 2 * tm * 4)        # f32 accumulator + bias

    out = pl.pallas_call(
        kernel,
        out_shape=jax.ShapeDtypeStruct((Mp, Np), out_dtype),
        grid=(Mp // tm, Np // tn, Kp // tk),
        in_specs=in_specs,
        out_specs=pl.BlockSpec((tm, tn), lambda i, j, k: (i, j)),
        scratch_shapes=[pltpu.VMEM((tm, tn), jnp.float32)],
        compiler_params=pltpu.CompilerParams(
            dimension_semantics=("parallel", "parallel", "arbitrary"),
            vmem_limit_bytes=_vmem_limit(footprint)),
    )(*args)
    if Mp == M and Np == N:
        return out
    return out[:M, :N]


def _bmm_kernel(a_ref, b_ref, o_ref, acc_ref):
    k = pl.program_id(2)

    @pl.when(k == 0)
    def _():
        acc_ref[...] = jnp.zeros_like(acc_ref)

    acc_ref[...] += jnp.dot(a_ref[0], b_ref[0], preferred_element_type=jnp.float32)

    @pl.when(k == pl.num_programs(2) - 1)
    def _():
        o_ref[0] = acc_ref[...]


def pallas_bmm(a, b):
    """Batched (B,M,K)@(B,K,N); f32 operands + f32 accumulation (feeds Cholesky).

    Grid: (batch, lane tiles, K tiles); lane axis padded to 128 multiples so
    stores are unmasked and lane-dense."""
    # TODO(synk): bf16 operands (f32 acc) would double the MXU rate on v6e/v7x;
    # requires numerical validation of the downstream Cholesky first.
    a = a.astype(jnp.float32)
    b = b.astype(jnp.float32)
    B, M, K = a.shape
    _, _, N = b.shape
    Kp, tk = _pick_tile(K, 128, 1024)
    Np, tn = _pick_tile(N, 128, 1024)
    a_p = a if Kp == K else jnp.pad(a, ((0, 0), (0, 0), (0, Kp - K)))
    b_p = b if (Kp == K and Np == N) else jnp.pad(b, ((0, 0), (0, Kp - K), (0, Np - N)))
    footprint = 2 * (M * tk + tk * tn + M * tn) * 4 + M * tn * 4
    out = pl.pallas_call(
        _bmm_kernel,
        out_shape=jax.ShapeDtypeStruct((B, M, Np), jnp.float32),
        grid=(B, Np // tn, Kp // tk),
        in_specs=[pl.BlockSpec((1, M, tk), lambda n, j, k: (n, 0, k)),
                  pl.BlockSpec((1, tk, tn), lambda n, j, k: (n, k, j))],
        out_specs=pl.BlockSpec((1, M, tn), lambda n, j, k: (n, 0, j)),
        scratch_shapes=[pltpu.VMEM((M, tn), jnp.float32)],
        compiler_params=pltpu.CompilerParams(
            dimension_semantics=("parallel", "parallel", "arbitrary"),
            vmem_limit_bytes=_vmem_limit(footprint)),
    )(a_p, b_p)
    if Np == N:
        return out
    return out[:, :, :N]


def _hypanet_kernel(s_ref, w1_ref, b1_ref, w2_ref, b2_ref, o_ref):
    # HyPaNet: (x-0.098)/0.0566 -> conv1x1(1->nc) -> sigmoid -> conv1x1(nc->4) -> softplus -> +1e-6
    s = (s_ref[...] - 0.098) / 0.0566                           # (N, 1)
    h = jax.nn.sigmoid(s * w1_ref[...] + b1_ref[...])           # (N, nc); in_nc==1 -> outer product
    o = jnp.dot(h, w2_ref[...], preferred_element_type=jnp.float32) + b2_ref[...]
    o_ref[...] = jax.nn.softplus(o) + 1e-6


def _solve_fft_kernel(alpha_ref, xr_ref, xi_ref, dr_ref, di_ref, yr_ref, yi_ref,
                      or_ref, oi_ref):
    a = alpha_ref[pl.program_id(0), 0]          # scalar (already divided by C_in)
    inv_a = 1.0 / a
    Xr = xr_ref[0][None]                         # (1, C_in, TS)
    Xi = xi_ref[0][None]
    Dr = dr_ref[0]                               # (C_out, C_in, TS)
    Di = di_ref[0]
    Yr = yr_ref[0][:, None, :]                   # (C_out, 1, TS)
    Yi = yi_ref[0][:, None, :]
    # Z = cmul(Y, D) + alpha * X          (matches the torch reference exactly)
    Zr = Yr * Dr - Yi * Di + a * Xr
    Zi = Yr * Di + Yi * Dr + a * Xi
    # numerator = sum_{C_in} conj(D) * Z
    numr = jnp.sum(Dr * Zr + Di * Zi, axis=1, keepdims=True)    # (C_out, 1, TS)
    numi = jnp.sum(Dr * Zi - Di * Zr, axis=1, keepdims=True)
    # factor1 - factor2 == (1/a) * (Z - D * num / (sum|D|^2 + a))
    den = jnp.sum(Dr * Dr + Di * Di, axis=1, keepdims=True) + a
    inv_den = pl.reciprocal(den, approx=True)
    inv_den = inv_den * (2.0 - den * inv_den)    # one Newton-Raphson refinement
    qr = numr * inv_den
    qi = numi * inv_den
    or_ref[0] = jnp.mean(Zr - (Dr * qr - Di * qi), axis=0) * inv_a
    oi_ref[0] = jnp.mean(Zi - (Dr * qi + Di * qr), axis=0) * inv_a


# ==================================== conv wrappers (channel-major) ====================================
# Activations flow as (C, N, H, W) so the im2col / residual plumbing needs no
# transposes and the Pallas matmul output (Co, N*Ho*Wo) is lane-dense.

def conv2d_cm(x, w, b=None, stride=1, padding=0, act="none", out_dtype=None):
    """x: (Ci, N, H, W), w: (Co, Ci, kh, kw), b: (Co,) -> (Co, N, Ho, Wo)."""
    if out_dtype is None:
        out_dtype = CONV_ACT_DTYPE
    Ci, N, H, W = x.shape
    Co, _, kh, kw = w.shape
    # Cast once BEFORE the kh*kw shifted-slice stack so the im2col rhs is built
    # directly in bf16 (halves its HBM traffic; pallas_matmul does no re-cast).
    # TODO(synk): at real scale move the shifted loads inside the conv kernel
    # (halo'd H tiles) so the kh*kw-duplicated rhs never hits HBM at all.
    xp = jnp.pad(_maybe_cast(x, CONV_MXU_DTYPE),
                 ((0, 0), (0, 0), (padding, padding), (padding, padding)))
    Ho = (H + 2 * padding - kh) // stride + 1
    Wo = (W + 2 * padding - kw) // stride + 1
    cols = [xp[:, :, i:i + stride * (Ho - 1) + 1:stride,
                     j:j + stride * (Wo - 1) + 1:stride]
            for i in range(kh) for j in range(kw)]
    rhs = jnp.stack(cols, axis=1).reshape(Ci * kh * kw, N * Ho * Wo)   # (K, S)
    lhs = _maybe_cast(w, CONV_MXU_DTYPE).reshape(Co, Ci * kh * kw)     # (Co, K)
    out = pallas_matmul(lhs, rhs, b, act,
                        mxu_dtype=CONV_MXU_DTYPE, out_dtype=out_dtype)  # (Co, S)
    return out.reshape(Co, N, Ho, Wo)


def conv_transpose2x2_cm(x, w, out_dtype=None):
    """ConvTranspose2d(k=2, s=2, bias=False); x: (Ci, N, H, W), w: (Ci, Co, 2, 2)."""
    if out_dtype is None:
        out_dtype = CONV_ACT_DTYPE
    Ci, N, H, W = x.shape
    _, Co, kh, kw = w.shape
    lhs = _maybe_cast(w, CONV_MXU_DTYPE).transpose(1, 2, 3, 0).reshape(Co * kh * kw, Ci)
    rhs = _maybe_cast(x, CONV_MXU_DTYPE).reshape(Ci, N * H * W)
    out = pallas_matmul(lhs, rhs, mxu_dtype=CONV_MXU_DTYPE, out_dtype=out_dtype)
    out = out.reshape(Co, kh, kw, N, H, W).transpose(0, 3, 4, 1, 5, 2)
    return out.reshape(Co, N, H * kh, W * kw)


# ==================================== sub-networks (channel-major) ====================================

def res_block(x, w1, w2):          # B.ResBlock mode='CRC', bias=False
    r = conv2d_cm(x, w1, padding=1, act="relu")
    r = conv2d_cm(r, w2, padding=1)
    return x + r


def res_blocks(x, ws):
    for (w1, w2) in ws:
        x = res_block(x, w1, w2)
    return x


def net_x(x, p):
    """x: (in_nc, N, H, W) channel-major; activations flow in bf16, tail emits f32."""
    x1 = _maybe_cast(x, CONV_ACT_DTYPE)
    x2 = conv2d_cm(res_blocks(x1, p["d1_res"]), p["d1_down"], stride=2, padding=0)
    x3 = conv2d_cm(res_blocks(x2, p["d2_res"]), p["d2_down"], stride=2, padding=0)
    x4 = conv2d_cm(res_blocks(x3, p["d3_res"]), p["d3_down"], stride=2, padding=0)
    xb = res_blocks(x4, p["body_res"])
    u3 = res_blocks(conv_transpose2x2_cm(xb + x4, p["u3_up"]), p["u3_res"])
    u2 = res_blocks(conv_transpose2x2_cm(u3 + x3, p["u2_up"]), p["u2_res"])
    u1 = res_blocks(conv_transpose2x2_cm(u2 + x2, p["u1_up"]), p["u1_res"])
    return conv2d_cm(u1 + x1[:-1], p["tail"], padding=1, out_dtype=jnp.float32)


def _conv_relu_conv(x, p, post_relu=False, out_dtype=None):
    (w1, b1), (w2, b2) = p
    h = conv2d_cm(x, w1, b1, padding=1, act="relu")
    return conv2d_cm(h, w2, b2, padding=1,
                     act="relu" if post_relu else "none", out_dtype=out_dtype)


def net_d(x, p):
    """x: (C+1, N, ds, ds) channel-major."""
    x1 = x                                              # keep the f32 residual (tiny array)
    h = _conv_relu_conv(x, p["m1"], post_relu=True)
    h = _conv_relu_conv(h, p["m2"], post_relu=True)
    h = _conv_relu_conv(h, p["m3"], out_dtype=jnp.float32)
    return h + x1[:-1]


def hypanet(sigma, p):
    # Tiny (N,4) workload: launch-overhead dominated, single full-block call.
    N = sigma.shape[0]
    s = sigma.reshape(N, 1).astype(jnp.float32)
    nc = p["w1"].shape[1]
    out = pl.pallas_call(
        _hypanet_kernel,
        out_shape=jax.ShapeDtypeStruct((N, 4), jnp.float32),
        grid=(1,),
        in_specs=[_full_spec((N, 1)), _full_spec((1, nc)), _full_spec((1, nc)),
                  _full_spec((nc, 4)), _full_spec((1, 4))],
        out_specs=_full_spec((N, 4)),
    )(s, p["w1"], p["b1"], p["w2"], p["b2"])
    return out.reshape(N, 4, 1, 1)


# ==================================== solvers ====================================

def p2o(psf, shape):
    kh, kw = psf.shape[-2], psf.shape[-1]
    otf = jnp.zeros(psf.shape[:-2] + tuple(shape), dtype=psf.dtype)
    otf = otf.at[..., :kh, :kw].set(psf)
    otf = jnp.roll(otf, (-(kh // 2), -(kw // 2)), axis=(-2, -1))
    return jnp.fft.rfft2(otf)


def solve_fft(X, D, Y, alpha, x_size):
    """X:(N,1,Cin,H,Wf) D:(N,Cout,Cin,H,Wf) Y:(N,Cout,1,H,Wf) complex; alpha:(N,1,1,1)."""
    N, _, C_in, H, Wf = X.shape
    C_out = D.shape[1]
    S = H * Wf
    Sp, ts = _pick_tile(S, 128, 2048)

    def prep(z, shape):
        z = z.reshape(shape + (S,)).astype(jnp.float32)
        if Sp == S:
            return z
        return jnp.pad(z, [(0, 0)] * len(shape) + [(0, Sp - S)])

    a_eff = (alpha.reshape(N, 1) / C_in).astype(jnp.float32)
    Xr = prep(jnp.real(X), (N, C_in))
    Xi = prep(jnp.imag(X), (N, C_in))
    Dr = prep(jnp.real(D), (N, C_out, C_in))
    Di = prep(jnp.imag(D), (N, C_out, C_in))
    Yr = prep(jnp.real(Y), (N, C_out))
    Yi = prep(jnp.imag(Y), (N, C_out))

    Or, Oi = pl.pallas_call(
        _solve_fft_kernel,
        out_shape=(jax.ShapeDtypeStruct((N, C_in, Sp), jnp.float32),
                   jax.ShapeDtypeStruct((N, C_in, Sp), jnp.float32)),
        grid=(N, Sp // ts),
        in_specs=[pl.BlockSpec(memory_space=pltpu.MemorySpace.SMEM),
                  pl.BlockSpec((1, C_in, ts), lambda n, s: (n, 0, s)),
                  pl.BlockSpec((1, C_in, ts), lambda n, s: (n, 0, s)),
                  pl.BlockSpec((1, C_out, C_in, ts), lambda n, s: (n, 0, 0, s)),
                  pl.BlockSpec((1, C_out, C_in, ts), lambda n, s: (n, 0, 0, s)),
                  pl.BlockSpec((1, C_out, ts), lambda n, s: (n, 0, s)),
                  pl.BlockSpec((1, C_out, ts), lambda n, s: (n, 0, s))],
        out_specs=(pl.BlockSpec((1, C_in, ts), lambda n, s: (n, 0, s)),
                   pl.BlockSpec((1, C_in, ts), lambda n, s: (n, 0, s))),
        compiler_params=pltpu.CompilerParams(
            dimension_semantics=("parallel", "parallel")),
    )(a_eff, Xr, Xi, Dr, Di, Yr, Yi)
    Xc = (Or[:, :, :S] + 1j * Oi[:, :, :S]).reshape(N, C_in, H, Wf)
    return jnp.fft.irfft2(Xc, s=tuple(int(v) for v in x_size))


def solve_ls(a_img, d, y, alpha, reg):
    """a_img:(N,Cin,H,W) d:(N,Cout,Cin,ds,ds) y:(N,Cout,H,W) alpha:(N,1,1,1)."""
    N, C_in, H, W = a_img.shape
    C_out, ds = d.shape[1], d.shape[-1]
    K = C_in * ds * ds
    HW = H * W
    L1 = 2 * ds - 1
    pf = ds - 1

    # ---- fused batched matmul: [a_img ; y] against the full-lag shift stack ----
    # The shift stack is built channel-last so it is written directly in its
    # final (N, HW, L*Cin) layout (no second 81x-sized transpose pass).
    # TODO(synk): at real scale replace the (2*ds-1)^2 shift stack with an
    # in-kernel Gram accumulation (HW tiles with a ds-1 halo kept in VMEM).
    xzp_t = jnp.pad(a_img, ((0, 0), (0, 0), (pf, pf), (pf, pf))).transpose(0, 2, 3, 1)
    shifts = [xzp_t[:, dh:dh + H, dw:dw + W, :]
              for dh in range(L1) for dw in range(L1)]
    B = jnp.stack(shifts, axis=3).reshape(N, HW, L1 * L1 * C_in)    # (N, HW, L*Cin)
    A = jnp.concatenate([a_img.reshape(N, C_in, HW),
                         y.reshape(N, C_out, HW)], axis=1)          # (N, Cin+Cout, HW)
    prod = pallas_bmm(A, B)                                         # (N, Cin+Cout, L*Cin)

    # ---- Gram matrix Q from the xtx part ----
    xtx_raw = prod[:, :C_in, :].reshape(N, C_in, L1, L1, C_in)
    xtx_raw = xtx_raw.transpose(0, 1, 4, 2, 3)                      # (N, i, j, dh, dw)
    idx = jnp.arange(ds)
    lag = idx[None, :] - idx[:, None] + (ds - 1)                    # [p, q]
    Q7 = xtx_raw[:, :, :, lag[:, :, None, None], lag[None, None, :, :]]
    # Q7 dims: (n, i, j, ph, qh, pw, qw) -> rows (i,ph,pw), cols (j,qh,qw)
    Q = Q7.transpose(0, 1, 3, 5, 2, 4, 6).reshape(N, K, K)

    # ---- xty from the 'same'-padding subset of lags ----
    off = (ds - 1) - (ds - 1) // 2
    xty_full = prod[:, C_in:, :].reshape(N, C_out, L1, L1, C_in)
    xty = xty_full[:, :, off:off + ds, off:off + ds, :]             # (N, Cout, ph, pw, ci)
    xty = xty.transpose(0, 1, 4, 2, 3).reshape(N, C_out, K)         # rows (ci, ph, pw)
    P = xty.transpose(0, 2, 1)                                      # (N, K, Cout)

    alpha_eff = (alpha * H * W * reg / (ds * ds * C_in)).reshape(N, 1, 1)
    Q = Q + alpha_eff * jnp.eye(K, dtype=jnp.float32)[None]
    P = P + alpha_eff * d.reshape(N, C_out, K).transpose(0, 2, 1)

    # TODO(synk): torch wraps the Cholesky in try/except RuntimeError (keeps old d on
    # failure); that data-dependent fallback is not reproduced here.
    def _chol_solve(Qm, Pm):
        Lc = jnp.linalg.cholesky(Qm)
        z = jax.scipy.linalg.solve_triangular(Lc, Pm, lower=True)
        return jax.scipy.linalg.solve_triangular(Lc, z, lower=True, trans=1)

    Dsol = jax.vmap(_chol_solve)(Q, P)                              # (N, K, Cout)
    return Dsol.reshape(N, C_in, ds, ds, C_out).transpose(0, 4, 1, 2, 3)


# ==================================== Stage / DCD ====================================

def stage(p, a, d, y, Y, alpha_x, beta_x, alpha_d, beta_d, reg):
    N, C_in, H, W = a.shape
    X = jnp.fft.rfft2(a)[:, None]                               # (N, 1, Cin, H, Wf)
    D = p2o(d, (H, W))                                          # (N, Cout, Cin, H, Wf)
    a_new = solve_fft(X, D, Y, alpha_x, (H, W))                 # (N, Cin, H, W)

    bx = jnp.broadcast_to(1.0 / jnp.sqrt(beta_x), (N, 1, H, W))
    netx_in = jnp.concatenate([a_new, bx], axis=1).transpose(1, 0, 2, 3)   # channel-major
    a_new = net_x(netx_in, p["net_x"]).transpose(1, 0, 2, 3)               # (N, Cin, H, W)

    d_new = solve_ls(a_new, d, y, alpha_d, reg)                 # (N, Cout, Cin, ds, ds)
    C_out, ds = d_new.shape[1], d_new.shape[-1]
    bd = jnp.broadcast_to(1.0 / jnp.sqrt(beta_d), (N, 1, ds, ds))
    d_flat = d_new.reshape(N, C_out * C_in, ds, ds)
    netd_in = jnp.concatenate([d_flat, bd], axis=1).transpose(1, 0, 2, 3)  # channel-major
    d_flat = net_d(netd_in, p["net_d"]).transpose(1, 0, 2, 3)
    return a_new, d_flat.reshape(N, C_out, C_in, ds, ds)


def dcd_forward(params, x, X, a, d, sigma, n_iter=N_ITER):
    for i in range(n_iter):
        hypas = hypanet(sigma, params["hypa"][i])               # (N, 4, 1, 1)
        alpha_x = hypas[:, 0:1]
        beta_x = hypas[:, 1:2]
        alpha_d = hypas[:, 2:3]
        beta_d = hypas[:, 3:4]
        a, d = stage(params["body"], a, d, x, X, alpha_x, beta_x, alpha_d, beta_d, 0.001)
    return a, d


# ==================================== init ====================================

def init_params(key):
    it = iter(jax.random.split(key, 128))

    def nk():
        return next(it)

    def conv_w(c_out, c_in, k):
        return jax.random.normal(nk(), (c_out, c_in, k, k), jnp.float32) / jnp.sqrt(float(c_in * k * k))

    def convT_w(c_in, c_out, k):
        return jax.random.normal(nk(), (c_in, c_out, k, k), jnp.float32) / jnp.sqrt(float(c_in * k * k))

    def conv_b(c_out):
        return jax.random.normal(nk(), (c_out,), jnp.float32) * 0.01

    in_nc = NC_X[0] + 1
    net_x_p = {
        "d1_res": [(conv_w(in_nc, in_nc, 3), conv_w(in_nc, in_nc, 3)) for _ in range(NB)],
        "d1_down": conv_w(NC_X[1], in_nc, 2),
        "d2_res": [(conv_w(NC_X[1], NC_X[1], 3), conv_w(NC_X[1], NC_X[1], 3)) for _ in range(NB)],
        "d2_down": conv_w(NC_X[2], NC_X[1], 2),
        "d3_res": [(conv_w(NC_X[2], NC_X[2], 3), conv_w(NC_X[2], NC_X[2], 3)) for _ in range(NB)],
        "d3_down": conv_w(NC_X[3], NC_X[2], 2),
        "body_res": [(conv_w(NC_X[3], NC_X[3], 3), conv_w(NC_X[3], NC_X[3], 3)) for _ in range(NB)],
        "u3_up": convT_w(NC_X[3], NC_X[2], 2),
        "u3_res": [(conv_w(NC_X[2], NC_X[2], 3), conv_w(NC_X[2], NC_X[2], 3)) for _ in range(NB)],
        "u2_up": convT_w(NC_X[2], NC_X[1], 2),
        "u2_res": [(conv_w(NC_X[1], NC_X[1], 3), conv_w(NC_X[1], NC_X[1], 3)) for _ in range(NB)],
        "u1_up": convT_w(NC_X[1], NC_X[0], 2),
        "u1_res": [(conv_w(NC_X[0], NC_X[0], 3), conv_w(NC_X[0], NC_X[0], 3)) for _ in range(NB)],
        "tail": conv_w(NC_X[0], NC_X[0], 3),
    }
    C = OUT_NC * NC_X[0]
    net_d_p = {
        "m1": [(conv_w(C, C + 1, 3), conv_b(C)), (conv_w(C, C, 3), conv_b(C))],
        "m2": [(conv_w(C, C, 3), conv_b(C)), (conv_w(C, C, 3), conv_b(C))],
        "m3": [(conv_w(C, C, 3), conv_b(C)), (conv_w(C, C, 3), conv_b(C))],
    }
    hypa = [{
        "w1": jax.random.normal(nk(), (1, HYPA_NC), jnp.float32),
        "b1": jax.random.normal(nk(), (1, HYPA_NC), jnp.float32) * 0.1,
        "w2": jax.random.normal(nk(), (HYPA_NC, 4), jnp.float32) / jnp.sqrt(float(HYPA_NC)),
        "b2": jax.random.normal(nk(), (1, 4), jnp.float32) * 0.1,
    } for _ in range(N_ITER)]
    return {"body": {"net_x": net_x_p, "net_d": net_d_p}, "hypa": hypa}


# ==================================== self tests ====================================

def _self_test():
    """Tolerance-asserted pure-JAX references for the tiled Pallas matmuls."""
    k1, k2, k3, k4, k5 = jax.random.split(jax.random.PRNGKey(1), 5)

    # pallas_matmul: bf16 operands, f32 out, ragged dims exercising the tiler.
    a = jax.random.normal(k1, (9, 81), jnp.float32)
    b = jax.random.normal(k2, (81, 520), jnp.float32)
    bias = jax.random.normal(k3, (9,), jnp.float32)
    ref = jnp.maximum(
        jnp.dot(a.astype(jnp.bfloat16).astype(jnp.float32),
                b.astype(jnp.bfloat16).astype(jnp.float32),
                precision=jax.lax.Precision.HIGHEST) + bias[:, None], 0.0)
    got = pallas_matmul(a, b, bias, act="relu",
                        mxu_dtype=jnp.bfloat16, out_dtype=jnp.float32)
    assert got.shape == ref.shape
    assert bool(jnp.allclose(got, ref, rtol=2e-2, atol=2e-2)), "pallas_matmul mismatch"

    # pallas_bmm: f32 path feeding the Cholesky solve.
    a3 = jax.random.normal(k4, (2, 9, 300), jnp.float32)
    b3 = jax.random.normal(k5, (2, 300, 648), jnp.float32)
    ref3 = jnp.einsum("bmk,bkn->bmn", a3, b3, precision=jax.lax.Precision.HIGHEST)
    got3 = pallas_bmm(a3, b3)
    assert got3.shape == ref3.shape
    assert bool(jnp.allclose(got3, ref3, rtol=2e-2, atol=2e-2)), "pallas_bmm mismatch"


# ==================================== main ====================================

if __name__ == "__main__":
    _self_test()

    key = jax.random.PRNGKey(0)
    kp, kx, ka, kd, ks = jax.random.split(key, 5)
    params = init_params(kp)

    N, H, W, DS = 2, 16, 16, 5
    C_in, C_out = NC_X[0], OUT_NC

    x_obs = jax.random.normal(kx, (N, C_out, H, W), jnp.float32) * 0.1 + 0.5
    X_obs = jnp.fft.rfft2(x_obs)[:, :, None]            # (N, C_out, 1, H, W//2+1) complex64
    a0 = jax.random.normal(ka, (N, C_in, H, W), jnp.float32) * 0.1
    d0 = jax.random.normal(kd, (N, C_out, C_in, DS, DS), jnp.float32) * 0.1
    sigma = jax.random.uniform(ks, (N, 1, 1, 1), jnp.float32) * 0.1

    fwd = jax.jit(functools.partial(dcd_forward, n_iter=N_ITER))
    a_out, d_out = fwd(params, x_obs, X_obs, a0, d0, sigma)
    jax.block_until_ready((a_out, d_out))

    assert a_out.shape == (N, C_in, H, W)
    assert d_out.shape == (N, C_out, C_in, DS, DS)
    assert bool(jnp.all(jnp.isfinite(a_out))) and bool(jnp.all(jnp.isfinite(d_out)))
    print("KERNEL_OK")
</pallas_src>

<mosaic_0001>
module attributes {stable_mosaic.version = 11 : i64} {
  func.func @_mm_kernel_bias(%arg0: i32, %arg1: i32, %arg2: i32, %arg3: memref<16x128xbf16, #tpu.memory_space<vmem>>, %arg4: memref<128x384xbf16, #tpu.memory_space<vmem>>, %arg5: memref<16x1xf32, #tpu.memory_space<vmem>>, %arg6: memref<16x384xf32, #tpu.memory_space<vmem>>, %arg7: memref<16x384xf32, #tpu.memory_space<vmem>>) attributes {dimension_semantics = [#tpu.dimension_semantics<parallel>, #tpu.dimension_semantics<parallel>, #tpu.dimension_semantics<arbitrary>], iteration_bounds = array<i64: 1, 2, 1>, scalar_prefetch = 0 : i64, scratch_operands = 1 : i64, tpu.core_type = #tpu.core_type<tc>, window_params = [{transform_indices = @transform_0, window_bounds = array<i64: 16, 128>}, {transform_indices = @transform_1, window_bounds = array<i64: 128, 384>}, {transform_indices = @transform_2, window_bounds = array<i64: 16, 1>}, {transform_indices = @transform_3, window_bounds = array<i64: 16, 384>}]} {
    %c0_i32 = arith.constant 0 : i32
    %0 = arith.cmpi eq, %arg2, %c0_i32 : i32
    %1 = arith.extui %0 : i1 to i32
    %c0_i32_0 = arith.constant 0 : i32
    %2 = arith.cmpi ne, %1, %c0_i32_0 : i32
    scf.if %2 {
      %cst_10 = arith.constant 0.000000e+00 : f32
      %12 = vector.broadcast %cst_10 : f32 to vector<16x384xf32>
      %c0_11 = arith.constant 0 : index
      %c0_12 = arith.constant 0 : index
      %13 = vector.load %arg7[%c0_11, %c0_12] : memref<16x384xf32, #tpu.memory_space<vmem>>, vector<16x384xf32>
      tpu.vector_store %arg7[%c0_11, %c0_12], %12 {strides = array<i32>} : memref<16x384xf32, #tpu.memory_space<vmem>>, vector<16x384xf32>,
    } else {
    }
    %c0 = arith.constant 0 : index
    %c0_1 = arith.constant 0 : index
    %3 = vector.load %arg7[%c0, %c0_1] : memref<16x384xf32, #tpu.memory_space<vmem>>, vector<16x384xf32>
    %c0_2 = arith.constant 0 : index
    %c0_3 = arith.constant 0 : index
    %4 = vector.load %arg3[%c0_2, %c0_3] : memref<16x128xbf16, #tpu.memory_space<vmem>>, vector<16x128xbf16>
    %c0_4 = arith.constant 0 : index
    %c0_5 = arith.constant 0 : index
    %5 = vector.load %arg4[%c0_4, %c0_5] : memref<128x384xbf16, #tpu.memory_space<vmem>>, vector<128x384xbf16>
    %cst = arith.constant dense<0.000000e+00> : vector<16x384xf32>
    %6 = tpu.matmul %4, %5, %cst {dimension_numbers = #tpu.dot_dimension_numbers<[1], [0], [0], [1], [0, 0, 1, 1], [], []>} : vector<16x128xbf16>, vector<128x384xbf16>, vector<16x384xf32> -> vector<16x384xf32>
    %7 = arith.addf %3, %6 : vector<16x384xf32>
    %c0_6 = arith.constant 0 : index
    %c0_7 = arith.constant 0 : index
    %8 = vector.load %arg7[%c0_6, %c0_7] : memref<16x384xf32, #tpu.memory_space<vmem>>, vector<16x384xf32>
    tpu.vector_store %arg7[%c0_6, %c0_7], %7 {strides = array<i32>} : memref<16x384xf32, #tpu.memory_space<vmem>>, vector<16x384xf32>,
    %c0_i32_8 = arith.constant 0 : i32
    %9 = arith.cmpi eq, %arg2, %c0_i32_8 : i32
    %10 = arith.extui %9 : i1 to i32
    %c0_i32_9 = arith.constant 0 : i32
    %11 = arith.cmpi ne, %10, %c0_i32_9 : i32
    scf.if %11 {
      %c0_10 = arith.constant 0 : index
      %c0_11 = arith.constant 0 : index
      %12 = vector.load %arg7[%c0_10, %c0_11] : memref<16x384xf32, #tpu.memory_space<vmem>>, vector<16x384xf32>
      %c0_12 = arith.constant 0 : index
      %c0_13 = arith.constant 0 : index
      %13 = vector.load %arg5[%c0_12, %c0_13] : memref<16x1xf32, #tpu.memory_space<vmem>>, vector<16x1xf32>
      %14 = vector.broadcast %13 : vector<16x1xf32> to vector<16x384xf32>
      %15 = arith.addf %12, %14 : vector<16x384xf32>
      %cst_14 = arith.constant 0.000000e+00 : f32
      %16 = vector.broadcast %cst_14 : f32 to vector<16x384xf32>
      %17 = arith.maximumf %15, %16 : vector<16x384xf32>
      %c0_15 = arith.constant 0 : index
      %c0_16 = arith.constant 0 : index
      %18 = vector.load %arg6[%c0_15, %c0_16] : memref<16x384xf32, #tpu.memory_space<vmem>>, vector<16x384xf32>
      tpu.vector_store %arg6[%c0_15, %c0_16], %17 {strides = array<i32>} : memref<16x384xf32, #tpu.memory_space<vmem>>, vector<16x384xf32>,
    } else {
    }
    return
  }
  func.func @transform_0(%arg0: i32, %arg1: i32, %arg2: i32) -> (i32, i32) {
    %c0_i32 = arith.constant 0 : i32
    return %arg0, %arg2 : i32, i32
  }
  func.func @transform_1(%arg0: i32, %arg1: i32, %arg2: i32) -> (i32, i32) {
    %c0_i32 = arith.constant 0 : i32
    return %arg2, %arg1 : i32, i32
  }
  func.func @transform_2(%arg0: i32, %arg1: i32, %arg2: i32) -> (i32, i32) {
    %c0_i32 = arith.constant 0 : i32
    %c0_i32_0 = arith.constant 0 : i32
    return %arg0, %c0_i32 : i32, i32
  }
  func.func @transform_3(%arg0: i32, %arg1: i32, %arg2: i32) -> (i32, i32) {
    %c0_i32 = arith.constant 0 : i32
    return %arg0, %arg1 : i32, i32
  }
}

</mosaic_0001>

<llo_original>
// kernel: tpu_custom_call.1
$region0: #{tpu_custom_call.1}
  #allocation0 [shape = 'u32[]', space=smem, size = 0x4, offset = 0x4, fixed_abs, tag = 'smem constant byte address 0x4 - core index']
  #allocation1 [shape = 'u32[144,128]{1,0:T(1,128)}', space=vmem, size = 0x12000, scoped, tag = 'internal scratch']
  #allocation2 [shape = 'f32[16,384]{1,0:T(8,128)}', space=vmem, size = 0x6000, scoped, tag = 'scratch operand']
  %s0 = inlined_call_operand.vmem [shape: bf16[16,128], index: 0, kind: input, shape index: {}]
  %s1 = inlined_call_operand.hbm [shape: bf16[128,768], index: 1, kind: input, shape index: {}]
  %s2 = inlined_call_operand.vmem [shape: f32[16,1], index: 2, kind: input, shape index: {}]
  %s3 = inlined_call_operand.hbm [shape: f32[16,768], index: 3, kind: output, shape index: {}]
  %s4 = sld [smem:[#allocation0]]
  $region57: #{tpu_custom_call.1} parent=0
    _
  %s6 = ssub.s32 1, %s4
  %s7 = scalar_select 0, %s6, %s4
  $region1: #{tpu_custom_call.1} parent=0
    #allocation3 [shape = 'u8[196608]{0}', space=vmem, size = 0x30000, scoped, tag = 'input window, operand 1']
    #allocation4 [shape = 's32[2]{0}', space=sflag, size = 0x8, scoped, tag = 'scoped memory for tpu_custom_call.1']
    #allocation5 [shape = 's32[2]{0}', space=sflag, size = 0x8, scoped, tag = 'scoped memory for tpu_custom_call.1']
    #allocation6 [shape = 'u8[49152]{0}', space=vmem, size = 0xc000, scoped, tag = 'output window, operand 0']
    %8 = vsyncpa [#allocation4], 0
    %s9 = scalar_lea.sflag [#allocation4], 1
    %10 = vsyncpa %s9, 0
    %11 = vsyncpa [#allocation5], 0
    %s12 = scalar_lea.sflag [#allocation5], 1
    %13 = vsyncpa %s12, 0
    loop: start=0, step=1, limit=4
    $region2: #{tpu_custom_call.1} parent=1 // loop_pre_header
      _
    $region3: #{tpu_custom_call.1} parent=1 // loop_header
      %s15 = sphi 0, %s19
      %p16 = scmp.ge.s32.totalorder %s15, 4
      %s22 = sphi 0, %s41
      %s23 = sphi 0, %s37
      %s24 = sphi 0, %s33
      %s25 = sphi 0, %s22
      %s26 = sphi 0, %s23
      %s27 = sphi 0, %s24
      %s28 = sphi 0, %s25
      %s29 = sphi 0, %s26
      %s30 = sphi 0, %s27
      %s46 = sphi 0, %s48
      %s49 = sphi 0, %s46
      %s50 = sphi 0, %s49
      %s66 = sphi 0, %s50
      %s74 = sphi 0, %s76
      %s77 = sphi 0, %s74
      %s78 = sphi 0, %s77
      %s94 = sphi 0, %s78
      %s100 = sphi 0, %s102
      %s103 = sphi 0, %s100
      %s104 = sphi 0, %s103
      %s120 = sphi 0, %s104
      %s128 = sphi 0, %s130
      %s131 = sphi 0, %s128
      %s132 = sphi 0, %s131
      %s148 = sphi 0, %s132
    $region4: #{tpu_custom_call.1} parent=1 // loop_header_branch
      %18 = sbr.rel (%p16) target = $region8
    $region5: #{tpu_custom_call.1} parent=1 // loop_body
      %s20 = ssub.s32 %s15, 1
      %s21 = ssub.s32 %s15, 2
      %s31 = sadd.s32 1, %s24
      %p32 = scmp.ge.s32.totalorder %s31, 1
      %s33 = scalar_select %p32, 0, %s31
      %s34 = sadd.s32 1, %s23
      %s35 = scalar_select %p32, %s34, %s23
      %p36 = scmp.ge.s32.totalorder %s35, 2
      %s37 = scalar_select %p36, 0, %s35
      %s38 = sadd.s32 1, %s22
      %s39 = scalar_select %p36, %s38, %s22
      %p40 = scmp.ge.s32.totalorder %s39, 1
      %s41 = scalar_select %p40, 0, %s39
      %s42 = ssub.s32 %s22, %s41
      %s43 = ssub.s32 %s24, %s33
      %s44 = sor.u32 %s42, %s43
      %p45 = scmp.eq.s32.totalorder %s44, 0
      %s47 = sadd.s32 %s46, 1
      %s48 = scalar_select %p45, %s46, %s47
      %p51 = pneg %p45
      %p52 = scmp.eq.s32.totalorder %s15, 1
      %p53 = por %p51, %p52
      %p54 = scmp.ne.s32.totalorder %s46, %s49
      %p55 = scmp.eq.s32.totalorder %s15, 0
      %p56 = por %p54, %p55
      %p57 = scmp.ne.s32.totalorder %s46, %s49
      %p58 = scmp.eq.s32.totalorder %s20, 1
      %p59 = por %p57, %p58
      %p60 = scmp.ne.s32.totalorder %s49, %s50
      %p61 = scmp.eq.s32.totalorder %s20, 0
      %p62 = por %p60, %p61
      %p63 = scmp.ne.s32.totalorder %s49, %s50
      %p64 = scmp.eq.s32.totalorder %s21, 1
      %p65 = por %p63, %p64
      %p67 = scmp.ne.s32.totalorder %s50, %s66
      %p68 = scmp.eq.s32.totalorder %s21, 0
      %p69 = por %p67, %p68
      %s70 = ssub.s32 %s24, %s33
      %s71 = ssub.s32 %s23, %s37
      %s72 = sor.u32 %s70, %s71
      %p73 = scmp.eq.s32.totalorder %s72, 0
      %s75 = sadd.s32 %s74, 1
      %s76 = scalar_select %p73, %s74, %s75
      %p79 = pneg %p73
      %p80 = scmp.eq.s32.totalorder %s15, 1
      %p81 = por %p79, %p80
      %p82 = scmp.ne.s32.totalorder %s74, %s77
      %p83 = scmp.eq.s32.totalorder %s15, 0
      %p84 = por %p82, %p83
      %p85 = scmp.ne.s32.totalorder %s74, %s77
      %p86 = scmp.eq.s32.totalorder %s20, 1
      %p87 = por %p85, %p86
      %p88 = scmp.ne.s32.totalorder %s77, %s78
      %p89 = scmp.eq.s32.totalorder %s20, 0
      %p90 = por %p88, %p89
      %p91 = scmp.ne.s32.totalorder %s77, %s78
      %p92 = scmp.eq.s32.totalorder %s21, 1
      %p93 = por %p91, %p92
      %p95 = scmp.ne.s32.totalorder %s78, %s94
      %p96 = scmp.eq.s32.totalorder %s21, 0
      %p97 = por %p95, %p96
      %s98 = ssub.s32 %s22, %s41
      %p99 = scmp.eq.s32.totalorder %s98, 0
      %s101 = sadd.s32 %s100, 1
      %s102 = scalar_select %p99, %s100, %s101
      %p105 = pneg %p99
      %p106 = scmp.eq.s32.totalorder %s15, 1
      %p107 = por %p105, %p106
      %p108 = scmp.ne.s32.totalorder %s100, %s103
      %p109 = scmp.eq.s32.totalorder %s15, 0
      %p110 = por %p108, %p109
      %p111 = scmp.ne.s32.totalorder %s100, %s103
      %p112 = scmp.eq.s32.totalorder %s20, 1
      %p113 = por %p111, %p112
      %p114 = scmp.ne.s32.totalorder %s103, %s104
      %p115 = scmp.eq.s32.totalorder %s20, 0
      %p116 = por %p114, %p115
      %p117 = scmp.ne.s32.totalorder %s103, %s104
      %p118 = scmp.eq.s32.totalorder %s21, 1
      %p119 = por %p117, %p118
      %p121 = scmp.ne.s32.totalorder %s104, %s120
      %p122 = scmp.eq.s32.totalorder %s21, 0
      %p123 = por %p121, %p122
      %s124 = ssub.s32 %s22, %s41
      %s125 = ssub.s32 %s23, %s37
      %s126 = sor.u32 %s124, %s125
      %p127 = scmp.eq.s32.totalorder %s126, 0
      %s129 = sadd.s32 %s128, 1
      %s130 = scalar_select %p127, %s128, %s129
      %p133 = pneg %p127
      %p134 = scmp.eq.s32.totalorder %s15, 1
      %p135 = por %p133, %p134
      %p136 = scmp.ne.s32.totalorder %s128, %s131
      %p137 = scmp.eq.s32.totalorder %s15, 0
      %p138 = por %p136, %p137
      %p139 = scmp.ne.s32.totalorder %s128, %s131
      %p140 = scmp.eq.s32.totalorder %s20, 1
      %p141 = por %p139, %p140
      %p142 = scmp.ne.s32.totalorder %s131, %s132
      %p143 = scmp.eq.s32.totalorder %s20, 0
      %p144 = por %p142, %p143
      %p145 = scmp.ne.s32.totalorder %s131, %s132
      %p146 = scmp.eq.s32.totalorder %s21, 1
      %p147 = por %p145, %p146
      %p149 = scmp.ne.s32.totalorder %s132, %s148
      %p150 = scmp.eq.s32.totalorder %s21, 0
      %p151 = por %p149, %p150
      %p152 = scmp.le.s32.totalorder 1, %s15
      %p153 = scmp.lt.s32.totalorder %s15, 3
      %p154 = pnand %p152, %p153
      %p155 = pneg %p154
      // Predicated region
      $region9: #{tpu_custom_call.1} parent=5 // pred_check
        _
      $region10: #{tpu_custom_call.1} parent=5 // pred_check_branch
        %157 = sbr.rel (%p154) target = $region12
      $region11: #{tpu_custom_call.1} parent=5 // pred_region
        %s158 = ssub.s32 %s15, 1
        // Predicated region
        $region13: #{tpu_custom_call.1} parent=11 // pred_check
          %p159 = pneg %p62
        $region14: #{tpu_custom_call.1} parent=11 // pred_check_branch
          %161 = sbr.rel (%p159) target = $region16
        $region15: #{tpu_custom_call.1} parent=11 // pred_region
          %s162 = smul.u32 2, %s25
          %p163 = scmp.lt.s32.totalorder %s162, 1
          %s164 = scalar_select %p163, %s162, 1
          %p165 = scmp.lt.s32.totalorder %s27, 0
          %s166 = scalar_select %p165, %s27, 0
          %s167 = sadd.s32 %s166, %s164
          %s168 = smul.addr %s167, 4
          %s169 = scalar_lea.vmem %s0, %s168
          %s170 = smul.u32 2, %s25
        $region16: #{tpu_custom_call.1} parent=11 // pred_fallthru
          _
        // Predicated region
        $region17: #{tpu_custom_call.1} parent=11 // pred_check
          %p171 = pneg %p116
        $region18: #{tpu_custom_call.1} parent=11 // pred_check_branch
          %173 = sbr.rel (%p171) target = $region20
        $region19: #{tpu_custom_call.1} parent=11 // pred_region
          %s174 = smul.u32 2, %s25
          %p175 = scmp.lt.s32.totalorder %s174, 1
          %s176 = scalar_select %p175, %s174, 1
          %s177 = smul.addr %s176, 8
          %s178 = scalar_lea.vmem %s2, %s177
          %s179 = smul.u32 2, %s25
        $region20: #{tpu_custom_call.1} parent=11 // pred_fallthru
          _
      $region12: #{tpu_custom_call.1} parent=5 // pred_fallthru
        _
      %p180 = scmp.lt.s32.totalorder %s15, 2
      // Predicated region
      $region21: #{tpu_custom_call.1} parent=5 // pred_check
        %p181 = pneg %p180
      $region22: #{tpu_custom_call.1} parent=5 // pred_check_branch
        %183 = sbr.rel (%p181) target = $region24
      $region23: #{tpu_custom_call.1} parent=5 // pred_region
        // Predicated region
        $region25: #{tpu_custom_call.1} parent=23 // pred_check
          %p184 = pneg %p84
        $region26: #{tpu_custom_call.1} parent=23 // pred_check_branch
          %186 = sbr.rel (%p184) target = $region28
        $region27: #{tpu_custom_call.1} parent=23 // pred_region
          %s187 = sand.u32 %s74, 1
          %s188 = scalar_lea.sflag [#allocation4], %s187
          %s189 = sand.u32 %s74, 1
          %s190 = smul.addr %s189, 192
          %s191 = scalar_lea.vmem [#allocation3], %s190
          %s192 = smul.u32 16, %s24
          %s193 = smul.u32 3, %s23
          %s195 = ssub.s32 3072, 3072
          %196 = vsyncadd %s188, %s195
          %s197 = smul.addr %s192, 6
          %s198 = sadd.s32 %s193, %s197
          %s199 = smul.addr %s198, 64
          %s200 = scalar_lea.hbm %s1, %s199
          %s201 = sshll.u32 %s191, 4
          %s202 = int_to_ptr.vmem [resolvable:$true] %s201
          %207 = dma.hbm_to_vmem [thread:$0]  %s200, 3072, %s202, %s188, 384, 192, 12
        $region28: #{tpu_custom_call.1} parent=23 // pred_fallthru
          _
      $region24: #{tpu_custom_call.1} parent=5 // pred_fallthru
        _
      %p208 = scmp.le.s32.totalorder 1, %s15
      %p209 = scmp.lt.s32.totalorder %s15, 3
      %p210 = pnand %p208, %p209
      %p211 = pneg %p210
      // Predicated region
      $region29: #{tpu_custom_call.1} parent=5 // pred_check
        _
      $region30: #{tpu_custom_call.1} parent=5 // pred_check_branch
        %213 = sbr.rel (%p210) target = $region32
      $region31: #{tpu_custom_call.1} parent=5 // pred_region
        %s214 = ssub.s32 %s15, 1
        %s215 = sand.u32 %s77, 1
        %s216 = scalar_lea.sflag [#allocation4], %s215
        %s217 = sand.u32 %s77, 1
        %s218 = smul.addr %s217, 192
        %s219 = scalar_lea.vmem [#allocation3], %s218
        // Predicated region
        $region33: #{tpu_custom_call.1} parent=31 // pred_check
          %p220 = pneg %p90
        $region34: #{tpu_custom_call.1} parent=31 // pred_check_branch
          %222 = sbr.rel (%p220) target = $region36
        $region35: #{tpu_custom_call.1} parent=31 // pred_region
          %223 = dma.done %s216, 3072
        $region36: #{tpu_custom_call.1} parent=31 // pred_fallthru
          _
        %s224 = smul.u32 2, %s25
        %p225 = scmp.lt.s32.totalorder %s224, 1
        %s226 = scalar_select %p225, %s224, 1
        %p227 = scmp.lt.s32.totalorder %s27, 0
        %s228 = scalar_select %p227, %s27, 0
        %s229 = sadd.s32 %s228, %s226
        %s230 = smul.addr %s229, 4
        %s231 = scalar_lea.vmem %s0, %s230
        %p232 = pneg %p62
        %p233 = pneg %p59
        %s234 = sand.u32 %s77, 1
        %s235 = scalar_lea.sflag [#allocation4], %s234
        %s236 = sand.u32 %s77, 1
        %s237 = smul.addr %s236, 192
        %s238 = scalar_lea.vmem [#allocation3], %s237
        %p239 = pneg %p90
        %p240 = pneg %p87
        %s241 = smul.u32 2, %s25
        %p242 = scmp.lt.s32.totalorder %s241, 1
        %s243 = scalar_select %p242, %s241, 1
        %s244 = smul.addr %s243, 8
        %s245 = scalar_lea.vmem %s2, %s244
        %p246 = pneg %p116
        %p247 = pneg %p113
        %p248 = pneg %p144
        %p249 = pneg %p141
        %s250 = sand.u32 %s131, 1
        %s251 = scalar_lea.sflag [#allocation5], %s250
        %s252 = sand.u32 %s131, 1
        %s253 = smul.addr %s252, 48
        %s254 = scalar_lea.vmem [#allocation6], %s253
        %s255 = smul.u32 2, %s25
        %p256 = scmp.lt.s32.totalorder %s255, 1
        %s257 = scalar_select %p256, %s255, 1
        %p258 = scmp.lt.s32.totalorder %s27, 0
        %s259 = scalar_select %p258, %s27, 0
        %s260 = sadd.s32 %s259, %s257
        %s261 = smul.addr %s260, 4
        %s262 = scalar_lea.vmem %s0, %s261
        %s263 = smul.u32 2, %s25
        %s264 = smul.u32 16, %s27
        %s265 = smul.u32 3, %s26
        %s266 = smul.u32 2, %s25
        %p267 = scmp.lt.s32.totalorder %s266, 1
        %s268 = scalar_select %p267, %s266, 1
        %s269 = smul.addr %s268, 8
        %s270 = scalar_lea.vmem %s2, %s269
        %s271 = smul.u32 2, %s25
        %s272 = smul.u32 2, %s25
        %s273 = smul.u32 3, %s26
        %p275 = scmp.eq.s32.totalorder %s27, 0
        // Predicated region
        $region37: #{tpu_custom_call.1} parent=31 // pred_check
          %p276 = pneg %p275
        $region38: #{tpu_custom_call.1} parent=31 // pred_check_branch
          %278 = sbr.rel (%p276) target = $region40
        $region39: #{tpu_custom_call.1} parent=31 // pred_region
          %279 = vst [vmem:[#allocation2] sm:$0xff] 0.0
          %280 = vst [vmem:[#allocation2 + $0x8] sm:$0xff] 0.0
          %281 = vst [vmem:[#allocation2 + $0x10] sm:$0xff] 0.0
          %282 = vst [vmem:[#allocation2 + $0x18] sm:$0xff] 0.0
          %283 = vst [vmem:[#allocation2 + $0x20] sm:$0xff] 0.0
          %284 = vst [vmem:[#allocation2 + $0x28] sm:$0xff] 0.0
        $region40: #{tpu_custom_call.1} parent=31 // pred_fallthru
          _
        %v285 = vld [vmem:[#allocation2] sm:$0xff]
        %v286 = vld [vmem:[#allocation2 + $0x8] sm:$0xff]
        %v287 = vld [vmem:[#allocation2 + $0x10] sm:$0xff]
        %v288 = vld [vmem:[#allocation2 + $0x18] sm:$0xff]
        %v289 = vld [vmem:[#allocation2 + $0x20] sm:$0xff]
        %v290 = vld [vmem:[#allocation2 + $0x28] sm:$0xff]
        %v291 = vld [vmem:[%s262] sm:$0xf]
        %v292 = vld [vmem:[%s262 + $0x4] sm:$0xf]
        %v293 = vld [vmem:[%s219] sm:$0xff]
        %v294 = vld [vmem:[%s219 + $0x8] sm:$0xf]
        %v295 = vld [vmem:[%s219 + $0xc] sm:$0xff]
        %v296 = vld [vmem:[%s219 + $0x14] sm:$0xf]
        %v297 = vld [vmem:[%s219 + $0x18] sm:$0xff]
        %v298 = vld [vmem:[%s219 + $0x20] sm:$0xf]
        %v299 = vld [vmem:[%s219 + $0x24] sm:$0xff]
        %v300 = vld [vmem:[%s219 + $0x2c] sm:$0xf]
        %v301 = vld [vmem:[%s219 + $0x30] sm:$0xff]
        %v302 = vld [vmem:[%s219 + $0x38] sm:$0xf]
        %v303 = vld [vmem:[%s219 + $0x3c] sm:$0xff]
        %v304 = vld [vmem:[%s219 + $0x44] sm:$0xf]
        %v305 = vld [vmem:[%s219 + $0x48] sm:$0xff]
        %v306 = vld [vmem:[%s219 + $0x50] sm:$0xf]
        %v307 = vld [vmem:[%s219 + $0x54] sm:$0xff]
        %v308 = vld [vmem:[%s219 + $0x5c] sm:$0xf]
        %v309 = vld [vmem:[%s219 + $0x60] sm:$0xff]
        %v310 = vld [vmem:[%s219 + $0x68] sm:$0xf]
        %v311 = vld [vmem:[%s219 + $0x6c] sm:$0xff]
        %v312 = vld [vmem:[%s219 + $0x74] sm:$0xf]
        %v313 = vld [vmem:[%s219 + $0x78] sm:$0xff]
        %v314 = vld [vmem:[%s219 + $0x80] sm:$0xf]
        %v315 = vld [vmem:[%s219 + $0x84] sm:$0xff]
        %v316 = vld [vmem:[%s219 + $0x8c] sm:$0xf]
        %v317 = vld [vmem:[%s219 + $0x90] sm:$0xff]
        %v318 = vld [vmem:[%s219 + $0x98] sm:$0xf]
        %v319 = vld [vmem:[%s219 + $0x9c] sm:$0xff]
        %v320 = vld [vmem:[%s219 + $0xa4] sm:$0xf]
        %v321 = vld [vmem:[%s219 + $0xa8] sm:$0xff]
        %v322 = vld [vmem:[%s219 + $0xb0] sm:$0xf]
        %v323 = vld [vmem:[%s219 + $0xb4] sm:$0xff]
        %v324 = vld [vmem:[%s219 + $0xbc] sm:$0xf]
        %v327 = vunpack.c.l.b16 %v291
        %v328 = vunpack.c.l.b16 %v292
        %v329 = vpack.c.b16 %v328, %v327
        %v363 = vunpack.c.l.b16 %v293
        %v364 = vunpack.c.h.b16 %v293
        %v365 = vunpack.c.l.b16 %v294
        %v366 = vunpack.c.l.b16 %v295
        %v367 = vunpack.c.h.b16 %v295
        %v368 = vunpack.c.l.b16 %v296
        %v369 = vunpack.c.l.b16 %v297
        %v370 = vunpack.c.h.b16 %v297
        %v371 = vunpack.c.l.b16 %v298
        %v372 = vunpack.c.l.b16 %v299
        %v373 = vunpack.c.h.b16 %v299
        %v374 = vunpack.c.l.b16 %v300
        %v375 = vunpack.c.l.b16 %v301
        %v376 = vunpack.c.h.b16 %v301
        %v377 = vunpack.c.l.b16 %v302
        %v378 = vunpack.c.l.b16 %v303
        %v379 = vunpack.c.h.b16 %v303
        %v380 = vunpack.c.l.b16 %v304
        %v381 = vunpack.c.l.b16 %v305
        %v382 = vunpack.c.h.b16 %v305
        %v383 = vunpack.c.l.b16 %v306
        %v384 = vunpack.c.l.b16 %v307
        %v385 = vunpack.c.h.b16 %v307
        %v386 = vunpack.c.l.b16 %v308
        %v387 = vunpack.c.l.b16 %v309
        %v388 = vunpack.c.h.b16 %v309
        %v389 = vunpack.c.l.b16 %v310
        %v390 = vunpack.c.l.b16 %v311
        %v391 = vunpack.c.h.b16 %v311
        %v392 = vunpack.c.l.b16 %v312
        %v393 = vunpack.c.l.b16 %v313
        %v394 = vunpack.c.h.b16 %v313
        %v395 = vunpack.c.l.b16 %v314
        %v396 = vunpack.c.l.b16 %v315
        %v397 = vunpack.c.h.b16 %v315
        %v398 = vunpack.c.l.b16 %v316
        %v399 = vunpack.c.l.b16 %v317
        %v400 = vunpack.c.h.b16 %v317
        %v401 = vunpack.c.l.b16 %v318
        %v402 = vunpack.c.l.b16 %v319
        %v403 = vunpack.c.h.b16 %v319
        %v404 = vunpack.c.l.b16 %v320
        %v405 = vunpack.c.l.b16 %v321
        %v406 = vunpack.c.h.b16 %v321
        %v407 = vunpack.c.l.b16 %v322
        %v408 = vunpack.c.l.b16 %v323
        %v409 = vunpack.c.h.b16 %v323
        %v410 = vunpack.c.l.b16 %v324
        %v411 = vpack.c.b16 %v366, %v363
        %v412 = vpack.c.b16 %v367, %v364
        %v413 = vpack.c.b16 %v368, %v365
        %v414 = vpack.c.b16 %v372, %v369
        %v415 = vpack.c.b16 %v373, %v370
        %v416 = vpack.c.b16 %v374, %v371
        %v417 = vpack.c.b16 %v378, %v375
        %v418 = vpack.c.b16 %v379, %v376
        %v419 = vpack.c.b16 %v380, %v377
        %v420 = vpack.c.b16 %v384, %v381
        %v421 = vpack.c.b16 %v385, %v382
        %v422 = vpack.c.b16 %v386, %v383
        %v423 = vpack.c.b16 %v390, %v387
        %v424 = vpack.c.b16 %v391, %v388
        %v425 = vpack.c.b16 %v392, %v389
        %v426 = vpack.c.b16 %v396, %v393
        %v427 = vpack.c.b16 %v397, %v394
        %v428 = vpack.c.b16 %v398, %v395
        %v429 = vpack.c.b16 %v402, %v399
        %v430 = vpack.c.b16 %v403, %v400
        %v431 = vpack.c.b16 %v404, %v401
        %v432 = vpack.c.b16 %v408, %v405
        %v433 = vpack.c.b16 %v409, %v406
        %v434 = vpack.c.b16 %v410, %v407
        %459 = vmatprep.subr.bf16.mxu0 %v412
        %460 = vmatpush1.bf16.msra.mxu0 %v411
        %461 = vmatprep.subr.bf16.mxu0 %v415
        %462 = vmatpush1.bf16.msra.mxu0 %v414
        %463 = vmatprep.subr.bf16.mxu0 %v418
        %464 = vmatpush1.bf16.msra.mxu0 %v417
        %465 = vmatprep.subr.bf16.mxu0 %v421
        %466 = vmatpush1.bf16.msra.mxu0 %v420
        %467 = vmatprep.subr.bf16.mxu0 %v424
        %468 = vmatpush1.bf16.msra.mxu0 %v423
        %469 = vmatprep.subr.bf16.mxu0 %v427
        %470 = vmatpush1.bf16.msra.mxu0 %v426
        %471 = vmatprep.subr.bf16.mxu0 %v430
        %472 = vmatpush1.bf16.msra.mxu0 %v429
        %473 = vmatprep.subr.bf16.mxu0 %v433
        %474 = vmatpush1.bf16.msra.mxu0 %v432
        %475 = vmatprep.subr.bf16.mxu0 0
        %476 = vmatpush1.bf16.msra.mxu0 0
        %477 = vmatprep.subr.bf16.mxu0 0
        %478 = vmatpush1.bf16.msra.mxu0 0
        %479 = vmatprep.subr.bf16.mxu0 0
        %480 = vmatpush1.bf16.msra.mxu0 0
        %481 = vmatprep.subr.bf16.mxu0 0
        %482 = vmatpush1.bf16.msra.mxu0 0
        %483 = vmatprep.subr.bf16.mxu0 0
        %484 = vmatpush1.bf16.msra.mxu0 0
        %485 = vmatprep.subr.bf16.mxu0 0
        %486 = vmatpush1.bf16.msra.mxu0 0
        %487 = vmatprep.subr.bf16.mxu0 0
        %488 = vmatpush1.bf16.msra.mxu0 0
        %489 = vmatprep.subr.bf16.mxu0 0
        %490 = vmatpush1.bf16.msra.mxu0 0
        %491 = vmatprep.mubr.bf16.mxu0 0
        %492 = vmatmul.mubr.bf16.gmra.mrb[0].mxu0 %v329
        %v493 = vpop.f32.mrb[0].mxu0
        %v494 = vadd.f32 0.0, %v493
        %v495 = vpop.f32.mrb[0].mxu0
        %v496 = vadd.f32 0.0, %v495
        %v497 = vpop.f32.mrb[0].mxu0
        %v498 = vadd.f32 0.0, %v497
        %v499 = vpop.f32.mrb[0].mxu0
        %v500 = vadd.f32 0.0, %v499
        %501 = vdwg.mxu0
        %502 = vmatprep.subr.bf16.mxu0 0
        %503 = vmatpush1.bf16.msra.mxu0 %v413
        %504 = vmatprep.subr.bf16.mxu0 0
        %505 = vmatpush1.bf16.msra.mxu0 %v416
        %506 = vmatprep.subr.bf16.mxu0 0
        %507 = vmatpush1.bf16.msra.mxu0 %v419
        %508 = vmatprep.subr.bf16.mxu0 0
        %509 = vmatpush1.bf16.msra.mxu0 %v422
        %510 = vmatprep.subr.bf16.mxu0 0
        %511 = vmatpush1.bf16.msra.mxu0 %v425
        %512 = vmatprep.subr.bf16.mxu0 0
        %513 = vmatpush1.bf16.msra.mxu0 %v428
        %514 = vmatprep.subr.bf16.mxu0 0
        %515 = vmatpush1.bf16.msra.mxu0 %v431
        %516 = vmatprep.subr.bf16.mxu0 0
        %517 = vmatpush1.bf16.msra.mxu0 %v434
        %518 = vmatprep.subr.bf16.mxu0 0
        %519 = vmatpush1.bf16.msra.mxu0 0
        %520 = vmatprep.subr.bf16.mxu0 0
        %521 = vmatpush1.bf16.msra.mxu0 0
        %522 = vmatprep.subr.bf16.mxu0 0
        %523 = vmatpush1.bf16.msra.mxu0 0
        %524 = vmatprep.subr.bf16.mxu0 0
        %525 = vmatpush1.bf16.msra.mxu0 0
        %526 = vmatprep.subr.bf16.mxu0 0
        %527 = vmatpush1.bf16.msra.mxu0 0
        %528 = vmatprep.subr.bf16.mxu0 0
        %529 = vmatpush1.bf16.msra.mxu0 0
        %530 = vmatprep.subr.bf16.mxu0 0
        %531 = vmatpush1.bf16.msra.mxu0 0
        %532 = vmatprep.subr.bf16.mxu0 0
        %533 = vmatpush1.bf16.msra.mxu0 0
        %534 = vmatprep.mubr.bf16.mxu0 0
        %535 = vmatmul.mubr.bf16.gmra.mrb[0].mxu0 %v329
        %v536 = vpop.f32.mrb[0].mxu0
        %v537 = vadd.f32 0.0, %v536
        %v538 = vpop.f32.mrb[0].mxu0
        %v539 = vpop.f32.mrb[0].mxu0
        %v540 = vadd.f32 0.0, %v539
        %v541 = vpop.f32.mrb[0].mxu0
        %542 = vdwg.mxu0
        %v543 = vadd.f32 %v285, %v494
        %v544 = vadd.f32 %v286, %v496
        %v545 = vadd.f32 %v287, %v537
        %v546 = vadd.f32 %v288, %v498
        %v547 = vadd.f32 %v289, %v500
        %v548 = vadd.f32 %v290, %v540
        %549 = vst [vmem:[#allocation2] sm:$0xff] %v543
        %550 = vst [vmem:[#allocation2 + $0x8] sm:$0xff] %v544
        %551 = vst [vmem:[#allocation2 + $0x10] sm:$0xff] %v545
        %552 = vst [vmem:[#allocation2 + $0x18] sm:$0xff] %v546
        %553 = vst [vmem:[#allocation2 + $0x20] sm:$0xff] %v547
        %554 = vst [vmem:[#allocation2 + $0x28] sm:$0xff] %v548
        // Predicated region
        $region41: #{tpu_custom_call.1} parent=31 // pred_check
          %p555 = pneg %p275
        $region42: #{tpu_custom_call.1} parent=31 // pred_check_branch
          %557 = sbr.rel (%p555) target = $region44
        $region43: #{tpu_custom_call.1} parent=31 // pred_region
          %v558 = vld [vmem:[#allocation2] sm:$0xff]
          %v559 = vld [vmem:[#allocation2 + $0x8] sm:$0xff]
          %v560 = vld [vmem:[#allocation2 + $0x10] sm:$0xff]
          %v561 = vld [vmem:[#allocation2 + $0x18] sm:$0xff]
          %v562 = vld [vmem:[#allocation2 + $0x20] sm:$0xff]
          %v563 = vld [vmem:[#allocation2 + $0x28] sm:$0xff]
          %v564 = vld [vmem:[%s270] sm:$0xff]
          %v565 = vld [vmem:[%s270 + $0x8] sm:$0xff]
          %567 = vset.pattern.permute.xlu0 0
          %568 = vperm.xlu0 %567, %v564
          %v569 = vpop.permute.xlu0 %568
          %572 = vset.pattern.permute.xlu0 0
          %573 = vperm.xlu0 %572, %v565
          %v574 = vpop.permute.xlu0 %573
          %v576 = vadd.f32 %v558, %v569
          %v577 = vadd.f32 %v559, %v569
          %v578 = vadd.f32 %v560, %v569
          %v579 = vadd.f32 %v561, %v574
          %v580 = vadd.f32 %v562, %v574
          %v581 = vadd.f32 %v563, %v574
          %v582 = vmax.f32 %v576, 0.0
          %v583 = vmax.f32 %v577, 0.0
          %v584 = vmax.f32 %v578, 0.0
          %v585 = vmax.f32 %v579, 0.0
          %v586 = vmax.f32 %v580, 0.0
          %v587 = vmax.f32 %v581, 0.0
          %588 = vst [vmem:[%s254] sm:$0xff] %v582
          %589 = vst [vmem:[%s254 + $0x8] sm:$0xff] %v583
          %590 = vst [vmem:[%s254 + $0x10] sm:$0xff] %v584
          %591 = vst [vmem:[%s254 + $0x18] sm:$0xff] %v585
          %592 = vst [vmem:[%s254 + $0x20] sm:$0xff] %v586
          %593 = vst [vmem:[%s254 + $0x28] sm:$0xff] %v587
        $region44: #{tpu_custom_call.1} parent=31 // pred_fallthru
          _
        %s594 = sand.u32 %s131, 1
        %s595 = scalar_lea.sflag [#allocation5], %s594
        %s596 = sand.u32 %s131, 1
        %s597 = smul.addr %s596, 48
        %s598 = scalar_lea.vmem [#allocation6], %s597
        // Predicated region
        $region45: #{tpu_custom_call.1} parent=31 // pred_check
          %p599 = pneg %p141
        $region46: #{tpu_custom_call.1} parent=31 // pred_check_branch
          %601 = sbr.rel (%p599) target = $region48
        $region47: #{tpu_custom_call.1} parent=31 // pred_region
          %s602 = smul.u32 2, %s25
          %s603 = smul.u32 3, %s26
          %s605 = ssub.s32 768, 768
          %606 = vsyncadd %s595, %s605
          %s607 = smul.addr %s602, 6
          %s608 = sadd.s32 %s603, %s607
          %s609 = smul.addr %s608, 128
          %s610 = scalar_lea.hbm %s3, %s609
          %s611 = sshll.u32 %s598, 4
          %s612 = int_to_ptr.vmem [resolvable:$true] %s611
          %617 = dma.vmem_to_hbm [thread:$0]  %s612, 768, %s610, %s595, 384, 768, 24
        $region48: #{tpu_custom_call.1} parent=31 // pred_fallthru
          _
      $region32: #{tpu_custom_call.1} parent=5 // pred_fallthru
        _
      %p618 = scmp.le.s32.totalorder 2, %s15
      // Predicated region
      $region49: #{tpu_custom_call.1} parent=5 // pred_check
        %p619 = pneg %p618
      $region50: #{tpu_custom_call.1} parent=5 // pred_check_branch
        %621 = sbr.rel (%p619) target = $region52
      $region51: #{tpu_custom_call.1} parent=5 // pred_region
        %s622 = ssub.s32 %s15, 2
        // Predicated region
        $region53: #{tpu_custom_call.1} parent=51 // pred_check
          %p623 = pneg %p147
        $region54: #{tpu_custom_call.1} parent=51 // pred_check_branch
          %625 = sbr.rel (%p623) target = $region56
        $region55: #{tpu_custom_call.1} parent=51 // pred_region
          %s626 = sand.u32 %s132, 1
          %s627 = scalar_lea.sflag [#allocation5], %s626
          %s628 = sand.u32 %s132, 1
          %s629 = smul.addr %s628, 48
          %s630 = scalar_lea.vmem [#allocation6], %s629
          %631 = dma.done %s627, 768
        $region56: #{tpu_custom_call.1} parent=51 // pred_fallthru
          _
      $region52: #{tpu_custom_call.1} parent=5 // pred_fallthru
        _
    $region6: #{tpu_custom_call.1} parent=1 // loop_footer
      %s19 = sadd.s32 1, %s15
    $region7: #{tpu_custom_call.1} parent=1 // loop_footer_branch
      %14 = sbr.rel target = $region3
    $region8: #{tpu_custom_call.1} parent=1 // loop_exit
      _
    %632 = vsyncpa [#allocation4], 1
    %s633 = scalar_lea.sflag [#allocation4], 1
    %634 = vsyncpa %s633, 1
    %635 = vsyncpa [#allocation5], 1
    %s636 = scalar_lea.sflag [#allocation5], 1
    %637 = vsyncpa %s636, 1

</llo_original>
